<compile_context>
chip_gen: v6e
topology: v6e:2x2x1
jax: 0.10.0
libtpu: 0.0.40
codegen_flags: <defaults>
</compile_context>

<pallas_src>
import functools

import numpy as np
import jax
import jax.numpy as jnp
from jax.experimental import pallas as pl
from jax.experimental.pallas import tpu as pltpu

MASS = np.asarray([
    0.0, 1.00782503207, 4.00260325415, 7.016004548, 9.012182201, 11.009305406,
    12, 14.00307400478, 15.99491461956, 18.998403224, 19.99244017542,
    22.98976928087, 23.985041699, 26.981538627, 27.97692653246, 30.973761629,
    31.972070999, 34.968852682, 39.96238312251, 38.963706679, 39.962590983,
    44.955911909, 47.947946281, 50.943959507, 51.940507472, 54.938045141,
    55.934937475, 58.933195048, 57.935342907, 62.929597474, 63.929142222,
    68.925573587, 73.921177767, 74.921596478, 79.916521271, 78.918337087,
    85.910610729, 84.911789737, 87.905612124, 88.905848295, 89.904704416,
    92.906378058, 97.905408169, 98.906254747, 101.904349312, 102.905504292,
    105.903485715, 106.90509682, 113.90335854, 114.903878484, 119.902194676,
    120.903815686, 129.906224399, 126.904472681, 131.904153457, 132.905451932,
    137.905247237, 138.906353267, 139.905438706, 140.907652769, 141.907723297,
    144.912749023, 151.919732425, 152.921230339, 157.924103912, 158.925346757,
    163.929174751, 164.93032207, 165.930293061, 168.93421325, 173.938862089,
    174.940771819, 179.946549953, 180.947995763, 183.950931188, 186.955753109,
    191.96148069, 192.96292643, 194.964791134, 196.966568662, 201.970643011,
    204.974427541, 207.976652071, 208.980398734, 208.982430435, 210.987496271,
    222.017577738, 222.01755173, 228.031070292, 227.027752127, 232.038055325,
    231.03588399, 238.050788247, 237.048173444, 242.058742611, 243.06138108,
    247.07035354, 247.07030708, 251.079586788, 252.082978512, 257.095104724,
    258.098431319, 255.093241131, 260.105504, 263.112547, 255.107398, 259.1145,
    262.122892, 263.128558, 265.136151, 281.162061, 272.153615, 283.171792,
    283.176451, 285.183698, 287.191186, 292.199786, 291.206564, 293.21467,
])


def _round_up(x, n):
    return ((x + n - 1) // n) * n


def _quadrupole_kernel(p_ref, o_ref, *, traceless):
    # p_ref : (5, A_pad, TM)  rows = [q, mass, x, y, z], molecules on lanes.
    # o_ref : (8, TM)         [xx, xy, xz, yy, yz, zz, 0, 0], lane-dense.
    q = p_ref[0].astype(jnp.float32)
    m = p_ref[1].astype(jnp.float32)
    cx = p_ref[2].astype(jnp.float32)
    cy = p_ref[3].astype(jnp.float32)
    cz = p_ref[4].astype(jnp.float32)

    # Mass-weighted center of mass per molecule (per lane).
    inv_msum = pl.reciprocal(jnp.sum(m, axis=0, keepdims=True), approx=False)
    x = cx - jnp.sum(cx * m, axis=0, keepdims=True) * inv_msum      # (A_pad, TM)
    y = cy - jnp.sum(cy * m, axis=0, keepdims=True) * inv_msum
    z = cz - jnp.sum(cz * m, axis=0, keepdims=True) * inv_msum

    # quad[j,k] = sum_a q_a * R_j * R_k : VPU products + sublane reductions.
    qx = q * x
    qy = q * y
    xx = jnp.sum(qx * x, axis=0, keepdims=True)                     # (1, TM)
    xy = jnp.sum(qx * y, axis=0, keepdims=True)
    xz = jnp.sum(qx * z, axis=0, keepdims=True)
    yy = jnp.sum(qy * y, axis=0, keepdims=True)
    yz = jnp.sum(qy * z, axis=0, keepdims=True)
    zz = jnp.sum(q * z * z, axis=0, keepdims=True)

    if traceless:
        d = (xx + yy + zz) * (1.0 / 3.0)
        xx = xx - d
        yy = yy - d
        zz = zz - d

    zero = jnp.zeros_like(xx)
    # Sublane-aligned (8, TM), fully lane-dense store.
    o_ref[...] = jnp.concatenate(
        [xx, xy, xz, yy, yz, zz, zero, zero], axis=0).astype(o_ref.dtype)


def _quadrupole_impl(q0, species, coordinates, *, traceless):
    M, A, _ = coordinates.shape
    out_dtype = q0.dtype

    # --- tiling ------------------------------------------------------------
    A_pad = _round_up(max(A, 1), 8)
    bytes_per_mol = 4 * 5 * A_pad                      # packed f32 payload/mol
    target_bytes = 3 * 1024 * 1024 // 2                # ~1.5 MB HBM per step
    TM = _round_up(-(-target_bytes // bytes_per_mol), 128)
    # Keep >= 2 grid steps when M allows it (v7x: 2 TensorCores share the
    # 'parallel' grid axis).
    TM = min(TM, max(128, _round_up(-(-M // 2), 128)))
    # VMEM safety cap: double-buffered input + output well under 12 MiB.
    vmem_cap = (12 * 1024 * 1024) // (2 * (bytes_per_mol + 32))
    TM = max(128, min(TM, max(128, (vmem_cap // 128) * 128)))
    Mp = _round_up(M, TM)

    # --- fused relayout (single jit pass): gather + pad + transpose + stack -
    # TODO(synk): if `species` is static across timesteps, the mass gather /
    # relayout of the mass rows could be cached across calls.
    q = q0[..., 0].astype(jnp.float32)                               # (M, A)
    masses = jnp.asarray(MASS, dtype=jnp.float32)[species]           # (M, A)
    coords = coordinates.astype(jnp.float32)                         # (M, A, 3)

    def relayout(a2d):  # (M, A) -> (A_pad, Mp); zero pad on both axes.
        a2d = jnp.transpose(a2d, (1, 0))
        return jnp.pad(a2d, ((0, A_pad - A), (0, Mp - M)))

    packed = jnp.stack(
        [relayout(q), relayout(masses),
         relayout(coords[..., 0]), relayout(coords[..., 1]),
         relayout(coords[..., 2])], axis=0)                          # (5, A_pad, Mp)

    # --- kernel ------------------------------------------------------------
    out_t = pl.pallas_call(
        functools.partial(_quadrupole_kernel, traceless=traceless),
        out_shape=jax.ShapeDtypeStruct((8, Mp), jnp.float32),
        grid=(Mp // TM,),
        in_specs=[pl.BlockSpec((5, A_pad, TM), lambda i: (0, 0, i))],
        out_specs=pl.BlockSpec((8, TM), lambda i: (0, i)),
        compiler_params=pltpu.CompilerParams(
            dimension_semantics=("parallel",),
            vmem_limit_bytes=32 * 1024 * 1024),
    )(packed)

    # --- tiny fused postprocessing: 6 unique components -> symmetric 3x3 ----
    comps = out_t[:6, :M]                                            # (6, M)
    idx = jnp.asarray([0, 1, 2, 1, 3, 4, 2, 4, 5], dtype=jnp.int32)
    quad = jnp.transpose(comps[idx], (1, 0)).reshape(M, 3, 3)
    return quad.astype(out_dtype)


quadrupole_pallas = jax.jit(_quadrupole_impl, static_argnames=("traceless",))


def quadrupole_ref(q0, species, coordinates, traceless=True):
    """Pure-JAX reference mirroring the PyTorch forward (for verification)."""
    q = q0
    masses = jnp.asarray(MASS, dtype=q.dtype)[species]               # (M, A)
    R0 = (coordinates * masses[..., None]).sum(axis=1, keepdims=True) \
        / masses.sum(axis=1).reshape(-1, 1, 1)
    R = coordinates - R0
    quad = ((q * R)[..., :, None] * R[..., None, :]).sum(axis=1)     # (M, 3, 3)
    if traceless:
        d = (quad[..., 0, 0] + quad[..., 1, 1] + quad[..., 2, 2]) / 3.0
        quad = quad - d[..., None, None] * jnp.eye(3, dtype=quad.dtype)
    return quad


if __name__ == "__main__":
    key = jax.random.PRNGKey(0)
    k1, k2, k3 = jax.random.split(key, 3)

    M, A = 2, 8  # n_molecule, n_atom
    species = jax.random.randint(k1, (M, A), 1, 10, dtype=jnp.int32)
    coordinates = jax.random.normal(k2, (M, A, 3), dtype=jnp.float32) * 2.0
    q0 = jax.random.normal(k3, (M, A, 1), dtype=jnp.float32) * 0.1

    out = quadrupole_pallas(q0, species, coordinates, traceless=True)
    jax.block_until_ready(out)

    ref = quadrupole_ref(q0, species, coordinates, traceless=True)
    np.testing.assert_allclose(np.asarray(out), np.asarray(ref),
                               rtol=1e-5, atol=1e-5)

    print("KERNEL_OK")
</pallas_src>

<mosaic_0001>
module attributes {stable_mosaic.version = 11 : i64} {
  func.func @_quadrupole_kernel(%arg0: i32, %arg1: memref<5x8x128xf32, #tpu.memory_space<vmem>>, %arg2: memref<8x128xf32, #tpu.memory_space<vmem>>) attributes {dimension_semantics = [#tpu.dimension_semantics<parallel>], iteration_bounds = array<i64: 1>, scalar_prefetch = 0 : i64, scratch_operands = 0 : i64, tpu.core_type = #tpu.core_type<tc>, window_params = [{transform_indices = @transform_0, window_bounds = array<i64: 5, 8, 128>}, {transform_indices = @transform_1, window_bounds = array<i64: 8, 128>}]} {
    %c0 = arith.constant 0 : index
    %c0_0 = arith.constant 0 : index
    %c0_1 = arith.constant 0 : index
    %0 = vector.load %arg1[%c0, %c0_0, %c0_1] : memref<5x8x128xf32, #tpu.memory_space<vmem>>, vector<1x8x128xf32>
    %1 = vector.shape_cast %0 : vector<1x8x128xf32> to vector<8x128xf32>
    %c1 = arith.constant 1 : index
    %c0_2 = arith.constant 0 : index
    %c0_3 = arith.constant 0 : index
    %2 = vector.load %arg1[%c1, %c0_2, %c0_3] : memref<5x8x128xf32, #tpu.memory_space<vmem>>, vector<1x8x128xf32>
    %3 = vector.shape_cast %2 : vector<1x8x128xf32> to vector<8x128xf32>
    %c2 = arith.constant 2 : index
    %c0_4 = arith.constant 0 : index
    %c0_5 = arith.constant 0 : index
    %4 = vector.load %arg1[%c2, %c0_4, %c0_5] : memref<5x8x128xf32, #tpu.memory_space<vmem>>, vector<1x8x128xf32>
    %5 = vector.shape_cast %4 : vector<1x8x128xf32> to vector<8x128xf32>
    %c3 = arith.constant 3 : index
    %c0_6 = arith.constant 0 : index
    %c0_7 = arith.constant 0 : index
    %6 = vector.load %arg1[%c3, %c0_6, %c0_7] : memref<5x8x128xf32, #tpu.memory_space<vmem>>, vector<1x8x128xf32>
    %7 = vector.shape_cast %6 : vector<1x8x128xf32> to vector<8x128xf32>
    %c4 = arith.constant 4 : index
    %c0_8 = arith.constant 0 : index
    %c0_9 = arith.constant 0 : index
    %8 = vector.load %arg1[%c4, %c0_8, %c0_9] : memref<5x8x128xf32, #tpu.memory_space<vmem>>, vector<1x8x128xf32>
    %9 = vector.shape_cast %8 : vector<1x8x128xf32> to vector<8x128xf32>
    %cst = arith.constant dense<0.000000e+00> : vector<128xf32>
    %10 = vector.multi_reduction <add>, %3, %cst [0] : vector<8x128xf32> to vector<128xf32>
    %11 = vector.shape_cast %10 : vector<128xf32> to vector<1x128xf32>
    %12 = tpu.reciprocal %11 : vector<1x128xf32> -> vector<1x128xf32>
    %13 = arith.mulf %5, %3 : vector<8x128xf32>
    %cst_10 = arith.constant dense<0.000000e+00> : vector<128xf32>
    %14 = vector.multi_reduction <add>, %13, %cst_10 [0] : vector<8x128xf32> to vector<128xf32>
    %15 = vector.shape_cast %14 : vector<128xf32> to vector<1x128xf32>
    %16 = arith.mulf %15, %12 : vector<1x128xf32>
    %17 = vector.broadcast %16 : vector<1x128xf32> to vector<8x128xf32>
    %18 = arith.subf %5, %17 : vector<8x128xf32>
    %19 = arith.mulf %7, %3 : vector<8x128xf32>
    %cst_11 = arith.constant dense<0.000000e+00> : vector<128xf32>
    %20 = vector.multi_reduction <add>, %19, %cst_11 [0] : vector<8x128xf32> to vector<128xf32>
    %21 = vector.shape_cast %20 : vector<128xf32> to vector<1x128xf32>
    %22 = arith.mulf %21, %12 : vector<1x128xf32>
    %23 = vector.broadcast %22 : vector<1x128xf32> to vector<8x128xf32>
    %24 = arith.subf %7, %23 : vector<8x128xf32>
    %25 = arith.mulf %9, %3 : vector<8x128xf32>
    %cst_12 = arith.constant dense<0.000000e+00> : vector<128xf32>
    %26 = vector.multi_reduction <add>, %25, %cst_12 [0] : vector<8x128xf32> to vector<128xf32>
    %27 = vector.shape_cast %26 : vector<128xf32> to vector<1x128xf32>
    %28 = arith.mulf %27, %12 : vector<1x128xf32>
    %29 = vector.broadcast %28 : vector<1x128xf32> to vector<8x128xf32>
    %30 = arith.subf %9, %29 : vector<8x128xf32>
    %31 = arith.mulf %1, %18 : vector<8x128xf32>
    %32 = arith.mulf %1, %24 : vector<8x128xf32>
    %33 = arith.mulf %31, %18 : vector<8x128xf32>
    %cst_13 = arith.constant dense<0.000000e+00> : vector<128xf32>
    %34 = vector.multi_reduction <add>, %33, %cst_13 [0] : vector<8x128xf32> to vector<128xf32>
    %35 = vector.shape_cast %34 : vector<128xf32> to vector<1x128xf32>
    %36 = arith.mulf %31, %24 : vector<8x128xf32>
    %cst_14 = arith.constant dense<0.000000e+00> : vector<128xf32>
    %37 = vector.multi_reduction <add>, %36, %cst_14 [0] : vector<8x128xf32> to vector<128xf32>
    %38 = vector.shape_cast %37 : vector<128xf32> to vector<1x128xf32>
    %39 = arith.mulf %31, %30 : vector<8x128xf32>
    %cst_15 = arith.constant dense<0.000000e+00> : vector<128xf32>
    %40 = vector.multi_reduction <add>, %39, %cst_15 [0] : vector<8x128xf32> to vector<128xf32>
    %41 = vector.shape_cast %40 : vector<128xf32> to vector<1x128xf32>
    %42 = arith.mulf %32, %24 : vector<8x128xf32>
    %cst_16 = arith.constant dense<0.000000e+00> : vector<128xf32>
    %43 = vector.multi_reduction <add>, %42, %cst_16 [0] : vector<8x128xf32> to vector<128xf32>
    %44 = vector.shape_cast %43 : vector<128xf32> to vector<1x128xf32>
    %45 = arith.mulf %32, %30 : vector<8x128xf32>
    %cst_17 = arith.constant dense<0.000000e+00> : vector<128xf32>
    %46 = vector.multi_reduction <add>, %45, %cst_17 [0] : vector<8x128xf32> to vector<128xf32>
    %47 = vector.shape_cast %46 : vector<128xf32> to vector<1x128xf32>
    %48 = arith.mulf %1, %30 : vector<8x128xf32>
    %49 = arith.mulf %48, %30 : vector<8x128xf32>
    %cst_18 = arith.constant dense<0.000000e+00> : vector<128xf32>
    %50 = vector.multi_reduction <add>, %49, %cst_18 [0] : vector<8x128xf32> to vector<128xf32>
    %51 = vector.shape_cast %50 : vector<128xf32> to vector<1x128xf32>
    %52 = arith.addf %35, %44 : vector<1x128xf32>
    %53 = arith.addf %52, %51 : vector<1x128xf32>
    %cst_19 = arith.constant 0.333333343 : f32
    %54 = vector.broadcast %cst_19 : f32 to vector<1x128xf32>
    %55 = arith.mulf %53, %54 : vector<1x128xf32>
    %56 = arith.subf %35, %55 : vector<1x128xf32>
    %57 = arith.subf %44, %55 : vector<1x128xf32>
    %58 = arith.subf %51, %55 : vector<1x128xf32>
    %cst_20 = arith.constant 0.000000e+00 : f32
    %59 = vector.broadcast %cst_20 : f32 to vector<1x128xf32>
    %60 = tpu.concatenate %56, %38, %41, %57, %47, %58, %59, %59 in 0 : vector<1x128xf32>, vector<1x128xf32>, vector<1x128xf32>, vector<1x128xf32>, vector<1x128xf32>, vector<1x128xf32>, vector<1x128xf32>, vector<1x128xf32> -> vector<8x128xf32>
    %c0_21 = arith.constant 0 : index
    %c0_22 = arith.constant 0 : index
    %61 = vector.load %arg2[%c0_21, %c0_22] : memref<8x128xf32, #tpu.memory_space<vmem>>, vector<8x128xf32>
    tpu.vector_store %arg2[%c0_21, %c0_22], %60 {strides = array<i32>} : memref<8x128xf32, #tpu.memory_space<vmem>>, vector<8x128xf32>,
    return
  }
  func.func @transform_0(%arg0: i32) -> (i32, i32, i32) {
    %c0_i32 = arith.constant 0 : i32
    %c0_i32_0 = arith.constant 0 : i32
    %c0_i32_1 = arith.constant 0 : i32
    return %c0_i32, %c0_i32_0, %arg0 : i32, i32, i32
  }
  func.func @transform_1(%arg0: i32) -> (i32, i32) {
    %c0_i32 = arith.constant 0 : i32
    %c0_i32_0 = arith.constant 0 : i32
    return %c0_i32, %arg0 : i32, i32
  }
}

</mosaic_0001>

<llo_original>
// kernel: _quadrupole_impl.1
$region0: #{_quadrupole_impl.1}
  #allocation0 [shape = 'u32[]', space=smem, size = 0x4, offset = 0x4, fixed_abs, tag = 'smem constant byte address 0x4 - core index']
  #allocation1 [shape = 'u32[144,128]{1,0:T(1,128)}', space=vmem, size = 0x12000, scoped, tag = 'internal scratch']
  %s0 = inlined_call_operand.vmem [shape: f32[5,8,128], index: 0, kind: input, shape index: {}]
  %s1 = inlined_call_operand.vmem [shape: f32[8,128], index: 1, kind: output, shape index: {}]
  %s2 = sld [smem:[#allocation0]]
  $region14: #{_quadrupole_impl.1} parent=0
    _
  %s4 = ssub.s32 1, %s2
  %s5 = scalar_select 0, %s4, %s2
  // Predicated region
  $region2: #{_quadrupole_impl.1} parent=0 // pred_check
    _
  $region3: #{_quadrupole_impl.1} parent=0 // pred_check_branch
    %7 = sbr.rel (0) target = $region5
  $region4: #{_quadrupole_impl.1} parent=0 // pred_region
    _
  $region5: #{_quadrupole_impl.1} parent=0 // pred_fallthru
    _
  %v8 = vld [vmem:[%s0] sm:$0xff]
  %s9 = scalar_lea.vmem %s0, 8
  %v10 = vld [vmem:[%s9] sm:$0xff]
  %s11 = scalar_lea.vmem %s0, 16
  %v12 = vld [vmem:[%s11] sm:$0xff]
  %s13 = scalar_lea.vmem %s0, 24
  %v14 = vld [vmem:[%s13] sm:$0xff]
  %s15 = scalar_lea.vmem %s0, 32
  %v16 = vld [vmem:[%s15] sm:$0xff]
  %v17 = vrot.slane %v10, 4
  %v18 = vadd.f32 %v10, %v17
  %v19 = vrot.slane %v18, 2
  %v20 = vadd.f32 %v18, %v19
  %v21 = vrot.slane %v20, 1
  %v22 = vadd.f32 %v20, %v21
  %v23 = vrcp.pop %v22
  %v24 = vmul.f32 %v12, %v10
  %v25 = vrot.slane %v24, 4
  %v26 = vadd.f32 %v24, %v25
  %v27 = vrot.slane %v26, 2
  %v28 = vadd.f32 %v26, %v27
  %v29 = vrot.slane %v28, 1
  %v30 = vadd.f32 %v28, %v29
  %v31 = vmul.f32 %v30, %v23
  %v32 = vsub.f32 %v12, %v31
  %v33 = vmul.f32 %v14, %v10
  %v34 = vrot.slane %v33, 4
  %v35 = vadd.f32 %v33, %v34
  %v36 = vrot.slane %v35, 2
  %v37 = vadd.f32 %v35, %v36
  %v38 = vrot.slane %v37, 1
  %v39 = vadd.f32 %v37, %v38
  %v40 = vmul.f32 %v39, %v23
  %v41 = vsub.f32 %v14, %v40
  %v42 = vmul.f32 %v16, %v10
  %v43 = vrot.slane %v42, 4
  %v44 = vadd.f32 %v42, %v43
  %v45 = vrot.slane %v44, 2
  %v46 = vadd.f32 %v44, %v45
  %v47 = vrot.slane %v46, 1
  %v48 = vadd.f32 %v46, %v47
  %v49 = vmul.f32 %v48, %v23
  %v50 = vsub.f32 %v16, %v49
  %v51 = vmul.f32 %v8, %v32
  %v52 = vmul.f32 %v8, %v41
  %v53 = vmul.f32 %v51, %v32
  %v54 = vrot.slane %v53, 4
  %v55 = vadd.f32 %v53, %v54
  %v56 = vrot.slane %v55, 2
  %v57 = vadd.f32 %v55, %v56
  %v58 = vrot.slane %v57, 1
  %v59 = vadd.f32 %v57, %v58
  %v60 = vmul.f32 %v51, %v41
  %v61 = vrot.slane %v60, 4
  %v62 = vadd.f32 %v60, %v61
  %v63 = vrot.slane %v62, 2
  %v64 = vadd.f32 %v62, %v63
  %v65 = vrot.slane %v64, 1
  %v66 = vadd.f32 %v64, %v65
  %v67 = vmul.f32 %v51, %v50
  %v68 = vrot.slane %v67, 4
  %v69 = vadd.f32 %v67, %v68
  %v70 = vrot.slane %v69, 2
  %v71 = vadd.f32 %v69, %v70
  %v72 = vrot.slane %v71, 1
  %v73 = vadd.f32 %v71, %v72
  %v74 = vmul.f32 %v52, %v41
  %v75 = vrot.slane %v74, 4
  %v76 = vadd.f32 %v74, %v75
  %v77 = vrot.slane %v76, 2
  %v78 = vadd.f32 %v76, %v77
  %v79 = vrot.slane %v78, 1
  %v80 = vadd.f32 %v78, %v79
  %v81 = vmul.f32 %v52, %v50
  %v82 = vrot.slane %v81, 4
  %v83 = vadd.f32 %v81, %v82
  %v84 = vrot.slane %v83, 2
  %v85 = vadd.f32 %v83, %v84
  %v86 = vrot.slane %v85, 1
  %v87 = vadd.f32 %v85, %v86
  %v88 = vmul.f32 %v8, %v50
  %v89 = vmul.f32 %v88, %v50
  %v90 = vrot.slane %v89, 4
  %v91 = vadd.f32 %v89, %v90
  %v92 = vrot.slane %v91, 2
  %v93 = vadd.f32 %v91, %v92
  %v94 = vrot.slane %v93, 1
  %v95 = vadd.f32 %v93, %v94
  %v96 = vadd.f32 %v59, %v80
  %v97 = vadd.f32 %v96, %v95
  %v98 = vmul.f32 %v97, 0.33333334
  %v99 = vsub.f32 %v59, %v98
  %v100 = vsub.f32 %v80, %v98
  %v101 = vsub.f32 %v95, %v98
  %vm102 = vcmask 1040384
  %v103 = vsel %vm102, %v99, %v66
  %vm104 = vcmask 1041408
  %v105 = vsel %vm104, %v103, %v73
  %vm106 = vcmask 1042432
  %v107 = vsel %vm106, %v105, %v100
  %vm108 = vcmask 1043456
  %v109 = vsel %vm108, %v107, %v87
  %vm110 = vcmask 1044480
  %v111 = vsel %vm110, %v109, %v101
  %vm112 = vcmask 1045504
  %v113 = vsel %vm112, %v111, 0.0
  %vm114 = vcmask 1046528
  %v115 = vsel %vm114, %v113, 0.0
  %116 = vst [vmem:[%s1] sm:$0xff] %v115
  // Predicated region
  $region6: #{_quadrupole_impl.1} parent=0 // pred_check
    _
  $region7: #{_quadrupole_impl.1} parent=0 // pred_check_branch
    %118 = sbr.rel (0) target = $region9
  $region8: #{_quadrupole_impl.1} parent=0 // pred_region
    _
  $region9: #{_quadrupole_impl.1} parent=0 // pred_fallthru
    _
  // Predicated region
  $region10: #{_quadrupole_impl.1} parent=0 // pred_check
    _
  $region11: #{_quadrupole_impl.1} parent=0 // pred_check_branch
    %120 = sbr.rel (0) target = $region13
  $region12: #{_quadrupole_impl.1} parent=0 // pred_region
    _
  $region13: #{_quadrupole_impl.1} parent=0 // pred_fallthru
    _

</llo_original>
